<compile_context>
chip_gen: v5e
topology: v5e:2x2
jax: 0.10.0
libtpu: 0.0.40
codegen_flags: <defaults>
</compile_context>

<pallas_src>
from functools import partial

import jax
import jax.numpy as jnp
from jax.experimental import pallas as pl
from jax.experimental.pallas import tpu as pltpu

_BLOCK_BYTES_CAP = 4 * 1024 * 1024  # per-block bytes; 4x (dbl-buffered in+out) fits VMEM
_LANE_CAP_MULT = 8                  # lane width up to 8*128 = 1024


def _copy_kernel(x_ref, o_ref):
    # Identity copy of one lane-dense (block_rows, lanes) tile.
    o_ref[...] = x_ref[...]


def _choose_slab(total):
    """Pick (lanes, rows) with lanes % 128 == 0, preferring rows % 8 == 0."""
    max_k = max(1, min(_LANE_CAP_MULT, total // 128))
    fallback = None
    for k in range(max_k, 0, -1):
        lanes = 128 * k
        if total % lanes:
            continue
        rows = total // lanes
        if fallback is None:
            fallback = (lanes, rows)
        if rows % 8 == 0:
            return lanes, rows
    return fallback  # may be None if total % 128 != 0


def _aliased_copy(x2d, block_shape, grid, total_bytes):
    """In-place (aliased) identity copy of a 2-D slab through VMEM tiles."""
    rows_b, lanes_b = block_shape
    return pl.pallas_call(
        _copy_kernel,
        out_shape=jax.ShapeDtypeStruct(x2d.shape, x2d.dtype),
        grid_spec=pl.GridSpec(
            grid=(grid,),
            in_specs=[pl.BlockSpec((rows_b, lanes_b), lambda i: (i, 0))],
            out_specs=pl.BlockSpec((rows_b, lanes_b), lambda i: (i, 0)),
        ),
        input_output_aliases={0: 0},  # no new HBM buffer; "copy" is in place
        compiler_params=pltpu.CompilerParams(
            dimension_semantics=("parallel",),  # shard blocks across TCs (v7x)
        ),
        cost_estimate=pl.CostEstimate(
            flops=0, transcendentals=0, bytes_accessed=2 * total_bytes
        ),
    )(x2d)


@partial(jax.jit, static_argnums=(1, 2, 3, 4))
def unflatten(x, C, D, H, W):
    """Pallas equivalent of UnFlatten(C, D, H, W).forward(x).

    x: (B, C*D*H*W) array. Returns (B, C, D, H, W).
    """
    B, N = x.shape
    assert N == C * D * H * W, f"cannot view {x.shape} as (B,{C},{D},{H},{W})"

    total = B * N
    itemsize = jnp.dtype(x.dtype).itemsize
    total_bytes = total * itemsize

    slab = _choose_slab(total)
    if slab is not None:
        lanes, rows = slab
        # Block rows: multiple of 8, capped so one block <= _BLOCK_BYTES_CAP.
        cap_rows = max(8, (_BLOCK_BYTES_CAP // (lanes * itemsize)) // 8 * 8)
        block_rows = min(rows, cap_rows)
        grid = pl.cdiv(rows, block_rows)
        flat = _aliased_copy(
            x.reshape(rows, lanes), (block_rows, lanes), grid, total_bytes
        )
    else:
        # Not lane-dense (total % 128 != 0): single full-array block fallback.
        flat = _aliased_copy(x, (B, N), 1, total_bytes)

    # Row-major contiguous reshape == torch .view semantics (metadata only).
    return flat.reshape(B, C, D, H, W)


if __name__ == "__main__":
    # Small shapes consistent with the module: B=2, C=4, D=4, H=8, W=8
    B, C, D, H, W = 2, 4, 4, 8, 8
    N = C * D * H * W  # 1024

    key = jax.random.PRNGKey(0)
    x = jax.random.normal(key, (B, N), dtype=jnp.float32)

    # Reference computed before the (aliased) kernel call.
    ref = x.reshape(B, C, D, H, W)

    out = jax.block_until_ready(unflatten(x, C, D, H, W))

    assert out.shape == (B, C, D, H, W), out.shape
    assert out.dtype == x.dtype
    assert bool(jnp.array_equal(out, ref))

    print("KERNEL_OK")
</pallas_src>

<mosaic_0001>
module attributes {stable_mosaic.version = 11 : i64} {
  func.func @_copy_kernel(%arg0: i32, %arg1: memref<8x256xf32, #tpu.memory_space<vmem>>, %arg2: memref<8x256xf32, #tpu.memory_space<vmem>>) attributes {dimension_semantics = [#tpu.dimension_semantics<parallel>], iteration_bounds = array<i64: 1>, scalar_prefetch = 0 : i64, scratch_operands = 0 : i64, tpu.core_type = #tpu.core_type<tc>, window_params = [{transform_indices = @transform_0, window_bounds = array<i64: 8, 256>}, {transform_indices = @transform_1, window_bounds = array<i64: 8, 256>}]} {
    %c0 = arith.constant 0 : index
    %c0_0 = arith.constant 0 : index
    %0 = vector.load %arg1[%c0, %c0_0] : memref<8x256xf32, #tpu.memory_space<vmem>>, vector<8x256xf32>
    %c0_1 = arith.constant 0 : index
    %c0_2 = arith.constant 0 : index
    %1 = vector.load %arg2[%c0_1, %c0_2] : memref<8x256xf32, #tpu.memory_space<vmem>>, vector<8x256xf32>
    tpu.vector_store %arg2[%c0_1, %c0_2], %0 {strides = array<i32>} : memref<8x256xf32, #tpu.memory_space<vmem>>, vector<8x256xf32>,
    return
  }
  func.func @transform_0(%arg0: i32) -> (i32, i32) {
    %c0_i32 = arith.constant 0 : i32
    %c0_i32_0 = arith.constant 0 : i32
    return %arg0, %c0_i32 : i32, i32
  }
  func.func @transform_1(%arg0: i32) -> (i32, i32) {
    %c0_i32 = arith.constant 0 : i32
    %c0_i32_0 = arith.constant 0 : i32
    return %arg0, %c0_i32 : i32, i32
  }
}

</mosaic_0001>

<llo_original>
// kernel: unflatten.1
$region0: #{unflatten.1}
  #allocation0 [shape = 'u32[]', space=smem, size = 0x4, offset = 0x4, fixed_abs, tag = 'smem constant byte address 0x4 - core index']
  #allocation1 [shape = 'u32[72,128]{1,0:T(1,128)}', space=vmem, size = 0x9000, scoped, tag = 'internal scratch']
  %s0 = inlined_call_operand.vmem [shape: f32[8,256], index: 0, kind: input, shape index: {}, may-alias: {0,1}]
  %s1 = inlined_call_operand.vmem [shape: f32[8,256], index: 1, kind: output, shape index: {}, may-alias: {0,1}]
  %s2 = sld [smem:[#allocation0]]
  $region14: #{unflatten.1} parent=0
    _
  %s4 = ssub.s32 1, %s2
  %s5 = scalar_select 0, %s4, %s2
  // Predicated region
  $region2: #{unflatten.1} parent=0 // pred_check
    _
  $region3: #{unflatten.1} parent=0 // pred_check_branch
    %7 = sbr.rel (0) target = $region5
  $region4: #{unflatten.1} parent=0 // pred_region
    _
  $region5: #{unflatten.1} parent=0 // pred_fallthru
    _
  %v8 = vld [vmem:[%s0] sm:$0xff]
  %v9 = vld [vmem:[%s0 + $0x8] sm:$0xff]
  %10 = vst [vmem:[%s1] sm:$0xff] %v8
  %11 = vst [vmem:[%s1 + $0x8] sm:$0xff] %v9
  // Predicated region
  $region6: #{unflatten.1} parent=0 // pred_check
    _
  $region7: #{unflatten.1} parent=0 // pred_check_branch
    %13 = sbr.rel (0) target = $region9
  $region8: #{unflatten.1} parent=0 // pred_region
    _
  $region9: #{unflatten.1} parent=0 // pred_fallthru
    _
  // Predicated region
  $region10: #{unflatten.1} parent=0 // pred_check
    _
  $region11: #{unflatten.1} parent=0 // pred_check_branch
    %15 = sbr.rel (0) target = $region13
  $region12: #{unflatten.1} parent=0 // pred_region
    _
  $region13: #{unflatten.1} parent=0 // pred_fallthru
    _

</llo_original>
